<compile_context>
chip_gen: v6e
topology: v6e:2x2x1
jax: 0.10.0
libtpu: 0.0.40
codegen_flags: <defaults>
</compile_context>

<pallas_src>
import functools
from typing import NamedTuple

import jax
import jax.numpy as jnp
from jax.experimental import pallas as pl
from jax.experimental.pallas import tpu as pltpu


_INV_SQRT2 = 0.7071067811865476  # 1/sqrt(2) for the exact (erf) GELU


def _round_up(n, m):
    return ((n + m - 1) // m) * m


def _gelu(h, approximate):
    if approximate:
        # tanh form lowers to the EUP (otherwise-idle VLIW slot); opt-in only,
        # since it breaks 1e-5 parity with PyTorch's default exact-erf nn.GELU.
        return jax.nn.gelu(h, approximate=True)
    return 0.5 * h * (1.0 + jax.lax.erf(h * _INV_SQRT2))


# --------------------------------------------------------------------------- #
# Kernels
# --------------------------------------------------------------------------- #
def _mlp_kernel_single(x_ref, w1_ref, b1_ref, w2_ref, b2_ref, o_ref, *,
                       approximate_gelu):
    """Hidden dim fits in one tile (nk == 1): no scratch, direct store."""
    h = jnp.dot(x_ref[...], w1_ref[...], preferred_element_type=jnp.float32)
    g = _gelu(h + b1_ref[...], approximate_gelu)
    y = jnp.dot(g.astype(w2_ref.dtype), w2_ref[...],
                preferred_element_type=jnp.float32)
    o_ref[...] = (y + b2_ref[...]).astype(o_ref.dtype)


def _mlp_kernel_acc(x_ref, w1_ref, b1_ref, w2_ref, b2_ref, o_ref, acc_ref, *,
                    approximate_gelu):
    """General case: hidden reduced over innermost grid axis, f32 accumulator."""
    k = pl.program_id(2)
    nk = pl.num_programs(2)

    @pl.when(k == 0)
    def _init():
        acc_ref[...] = jnp.zeros_like(acc_ref)

    h = jnp.dot(x_ref[...], w1_ref[...], preferred_element_type=jnp.float32)
    g = _gelu(h + b1_ref[...], approximate_gelu)
    acc_ref[...] += jnp.dot(g.astype(w2_ref.dtype), w2_ref[...],
                            preferred_element_type=jnp.float32)

    @pl.when(k == nk - 1)
    def _finalize():
        o_ref[...] = (acc_ref[...] + b2_ref[...]).astype(o_ref.dtype)


# --------------------------------------------------------------------------- #
# Parameter preparation (run ONCE, off the hot path)
# --------------------------------------------------------------------------- #
class MlpParams(NamedTuple):
    w1: jax.Array          # (Cip, Hp)  compute dtype
    b1: jax.Array          # (1, Hp)    float32
    w2: jax.Array          # (Hp, Cop)  compute dtype
    b2: jax.Array          # (1, Cop)   float32
    in_features: int
    hidden_features: int
    out_features: int


def prepare_mlp_params(w1, b1, w2, b2, *, compute_dtype=jnp.bfloat16):
    """Pad (lane-dense, zero padding is exact) and cast the weights once.

    w1: (C_in, H), b1: (H,), w2: (H, C_out), b2: (C_out,)  (pre-transposed
    nn.Linear weights).  compute_dtype=jnp.bfloat16 (default) gives MXU-native
    matmul operands on v5e/v6e/v7x; pass jnp.float32 for exact f32 parity.
    Biases stay f32 (they are added to the f32 accumulator inside the kernel).
    """
    C_in, H = w1.shape
    C_out = w2.shape[1]
    Cip = _round_up(C_in, 128)
    Hp = _round_up(H, 128)
    Cop = _round_up(C_out, 128)
    w1p = jnp.pad(w1, ((0, Cip - C_in), (0, Hp - H))).astype(compute_dtype)
    w2p = jnp.pad(w2, ((0, Hp - H), (0, Cop - C_out))).astype(compute_dtype)
    b1p = jnp.pad(b1.astype(jnp.float32), (0, Hp - H)).reshape(1, Hp)
    b2p = jnp.pad(b2.astype(jnp.float32), (0, Cop - C_out)).reshape(1, Cop)
    return MlpParams(w1p, b1p, w2p, b2p, int(C_in), int(H), int(C_out))


# --------------------------------------------------------------------------- #
# Tile selection / VMEM budgeting
# --------------------------------------------------------------------------- #
def _divisors_128_desc(n):
    # n is a multiple of 128; list its divisors that are multiples of 128.
    return [d for d in range(n, 0, -128) if n % d == 0]


def _footprint_bytes(tm, th, tn, cip, mm_bytes, out_bytes):
    f = 2 * tm * cip * mm_bytes          # x tile (double-buffered)
    f += 2 * cip * th * mm_bytes         # W1 block
    f += 2 * th * 4 + 2 * tn * 4         # b1 / b2 slices (f32)
    f += 2 * th * tn * mm_bytes          # W2 block
    f += 2 * tm * tn * out_bytes         # output block
    f += tm * tn * 4                     # f32 accumulator scratch
    f += 2 * tm * th * 4                 # h / gelu(h) f32 temporaries
    return f


def _select_tiles(M, cip, hp, cop, mm_bytes, out_bytes, tm, th, tn, budget):
    # Token tile: multiple of 8; guarantee >=2 token tiles so the "parallel"
    # M axis can shard across v7x's two TensorCores.
    tm = max(8, _round_up(min(tm, _round_up(M, 8)), 8))
    if M > 8 and _round_up(M, tm) // tm < 2:
        tm = max(8, _round_up((M + 1) // 2, 8))
    # Hidden / output tiles: multiples of 128 that divide the padded dims.
    th_divs = _divisors_128_desc(hp)
    tn_divs = _divisors_128_desc(cop)
    th = next(d for d in th_divs if d <= max(th, 128))
    tn = next(d for d in tn_divs if d <= max(tn, 128))
    # Shrink until the per-step footprint fits the budget with ~20% headroom,
    # preferring to tile the output width, then the hidden dim, then tokens
    # (keep tm large: more MXU work per streamed weight byte — matters most on
    # v5e where the weight-streaming loop is likeliest HBM-bound).
    while _footprint_bytes(tm, th, tn, cip, mm_bytes, out_bytes) > int(0.8 * budget):
        if tn > 128:
            tn = next(d for d in tn_divs if d < tn)
        elif th > 128:
            th = next(d for d in th_divs if d < th)
        elif tm > 64:
            tm = max(64, _round_up(tm // 2, 8))
        else:
            break
    return tm, th, tn


# --------------------------------------------------------------------------- #
# Forward
# --------------------------------------------------------------------------- #
def mlp_apply(x, params, *, tm=256, th=512, tn=2048,
              approximate_gelu=False, weight_buffers=2,
              vmem_budget_bytes=48 * 1024 * 1024):
    """x: (B, L, C_in) -> (B, L, C_out), using pre-padded/cast MlpParams."""
    B, L, C_in = x.shape
    assert C_in == params.in_features
    out_dtype = x.dtype
    M = B * L

    w1p, b1p, w2p, b2p = params.w1, params.b1, params.w2, params.b2
    Cip, Hp = w1p.shape
    Cop = w2p.shape[1]
    mm_dtype = w1p.dtype
    mm_bytes = jnp.dtype(mm_dtype).itemsize
    out_bytes = jnp.dtype(out_dtype).itemsize

    tm, th, tn = _select_tiles(M, Cip, Hp, Cop, mm_bytes, out_bytes,
                               tm, th, tn, vmem_budget_bytes)
    Mp = _round_up(M, tm)

    # x padding / cast only when actually required.
    x2d = x.reshape(M, C_in)
    if x2d.dtype != mm_dtype:
        x2d = x2d.astype(mm_dtype)
    if Mp != M or Cip != C_in:
        x2d = jnp.pad(x2d, ((0, Mp - M), (0, Cip - C_in)))

    ni, nj, nk = Mp // tm, Cop // tn, Hp // th
    grid = (ni, nj, nk)

    # Explicit per-step VMEM budget (documents the v7x 64 MiB per-TC ceiling).
    footprint = _footprint_bytes(tm, th, tn, Cip, mm_bytes, out_bytes)
    vmem_limit = int(min(vmem_budget_bytes,
                         max(footprint * 5 // 4, 32 * 1024 * 1024)))

    def _wspec(shape, index_map):
        if weight_buffers > 2:
            # Deeper weight pipelining: affordable on v5e/v6e (128 MiB VMEM);
            # keep the default 2 on v7x (64 MiB is already the constraint).
            return pl.BlockSpec(shape, index_map,
                                pipeline_mode=pl.Buffered(weight_buffers))
        return pl.BlockSpec(shape, index_map)

    in_specs = [
        pl.BlockSpec((tm, Cip), lambda i, j, k: (i, 0)),   # x tile (resident over j,k)
        _wspec((Cip, th), lambda i, j, k: (0, k)),          # W1 hidden slice
        pl.BlockSpec((1, th), lambda i, j, k: (0, k)),      # b1 hidden slice
        _wspec((th, tn), lambda i, j, k: (k, j)),            # W2 (hidden, out) block
        pl.BlockSpec((1, tn), lambda i, j, k: (0, j)),       # b2 out slice
    ]
    out_spec = pl.BlockSpec((tm, tn), lambda i, j, k: (i, j))

    if nk == 1:
        kernel = functools.partial(_mlp_kernel_single,
                                   approximate_gelu=approximate_gelu)
        scratch = []
    else:
        kernel = functools.partial(_mlp_kernel_acc,
                                   approximate_gelu=approximate_gelu)
        scratch = [pltpu.VMEM((tm, tn), jnp.float32)]

    out2d = pl.pallas_call(
        kernel,
        out_shape=jax.ShapeDtypeStruct((Mp, Cop), out_dtype),
        grid_spec=pltpu.PrefetchScalarGridSpec(
            num_scalar_prefetch=0,
            grid=grid,
            in_specs=in_specs,
            out_specs=out_spec,
            scratch_shapes=scratch,
        ),
        compiler_params=pltpu.CompilerParams(
            # token / output-width axes shard across v7x's 2 TCs; hidden axis
            # is the reduction -> arbitrary (innermost).
            dimension_semantics=("parallel", "parallel", "arbitrary"),
            vmem_limit_bytes=vmem_limit,
        ),
    )(x2d, w1p, b1p, w2p, b2p)

    return out2d[:M, :params.out_features].reshape(B, L, params.out_features)


def mlp_pallas(x, w1, b1, w2, b2, *, compute_dtype=jnp.bfloat16, **kwargs):
    """One-shot convenience (pads/casts weights per call).  For repeated use,
    call prepare_mlp_params once and reuse mlp_apply."""
    params = prepare_mlp_params(w1, b1, w2, b2, compute_dtype=compute_dtype)
    return mlp_apply(x, params, **kwargs)


def mlp_reference(x, w1, b1, w2, b2):
    h = jnp.einsum("blc,ch->blh", x, w1) + b1
    h = 0.5 * h * (1.0 + jax.lax.erf(h * _INV_SQRT2))
    return jnp.einsum("blh,ho->blo", h, w2) + b2


# --------------------------------------------------------------------------- #
# Demo / self-test
# --------------------------------------------------------------------------- #
if __name__ == "__main__":
    # TODO(synk): nn.Dropout with drop=0.0 (module default) is identity; no dropout implemented.
    # ---- Config 1: the module's small demo shapes (nk == 1 fast path) ------
    in_features, hidden_features, out_features = 32, 64, 32
    B, L = 2, 256  # 512 tokens -> 2 token tiles (keeps both v7x TCs busy)

    key = jax.random.PRNGKey(0)
    kx, k1, kb1, k2, kb2, kx2, k3, kb3, k4, kb4 = jax.random.split(key, 10)

    x = jax.random.normal(kx, (B, L, in_features), dtype=jnp.float32)
    # nn.Linear-equivalent params, stored pre-transposed as (in, out)
    w1 = jax.random.normal(k1, (in_features, hidden_features), jnp.float32) * 0.1
    b1 = jax.random.normal(kb1, (hidden_features,), jnp.float32) * 0.1
    w2 = jax.random.normal(k2, (hidden_features, out_features), jnp.float32) * 0.1
    b2 = jax.random.normal(kb2, (out_features,), jnp.float32) * 0.1

    ref = mlp_reference(x, w1, b1, w2, b2)

    # f32-operand path: exact parity with the f32 PyTorch module (erf GELU).
    params_f32 = prepare_mlp_params(w1, b1, w2, b2, compute_dtype=jnp.float32)
    out = jax.block_until_ready(mlp_apply(x, params_f32))
    assert out.shape == (B, L, out_features)
    assert jnp.allclose(out, ref, atol=1e-5, rtol=1e-5)

    # Default path: bf16 matmul operands (MXU-native on v5e/v6e/v7x);
    # bias/GELU/accumulation stay f32 -> looser tolerance is expected.
    params_bf16 = prepare_mlp_params(w1, b1, w2, b2)
    out_bf16 = jax.block_until_ready(mlp_apply(x, params_bf16))
    assert jnp.allclose(out_bf16, ref, atol=5e-2, rtol=5e-2)

    # Opt-in tanh GELU (EUP slot); small activation-level deviation from erf.
    out_tanh = jax.block_until_ready(
        mlp_apply(x, params_f32, approximate_gelu=True))
    assert jnp.allclose(out_tanh, ref, atol=1e-2, rtol=1e-2)

    # ---- Config 2: exercises the multi-tile reduction path (nk>1, nj>1),
    # non-aligned C_in/M, token padding and the >=2-token-tile megacore cap. --
    C2_in, H2, C2_out = 96, 384, 256
    B2, L2 = 2, 200  # M = 400
    x2 = jax.random.normal(kx2, (B2, L2, C2_in), dtype=jnp.float32)
    w1_2 = jax.random.normal(k3, (C2_in, H2), jnp.float32) * 0.1
    b1_2 = jax.random.normal(kb3, (H2,), jnp.float32) * 0.1
    w2_2 = jax.random.normal(k4, (H2, C2_out), jnp.float32) * 0.1
    b2_2 = jax.random.normal(kb4, (C2_out,), jnp.float32) * 0.1

    ref2 = mlp_reference(x2, w1_2, b1_2, w2_2, b2_2)
    params2 = prepare_mlp_params(w1_2, b1_2, w2_2, b2_2, compute_dtype=jnp.float32)
    out2 = jax.block_until_ready(mlp_apply(x2, params2, th=128, tn=128))
    assert out2.shape == (B2, L2, C2_out)
    assert jnp.allclose(out2, ref2, atol=1e-4, rtol=1e-4)

    print("KERNEL_OK")
</pallas_src>

<mosaic_0001>
module attributes {stable_mosaic.version = 11 : i64} {
  func.func @_mlp_kernel_single(%arg0: i32, %arg1: i32, %arg2: i32, %arg3: memref<256x128xf32, #tpu.memory_space<vmem>>, %arg4: memref<128x128xf32, #tpu.memory_space<vmem>>, %arg5: memref<1x128xf32, #tpu.memory_space<vmem>>, %arg6: memref<128x128xf32, #tpu.memory_space<vmem>>, %arg7: memref<1x128xf32, #tpu.memory_space<vmem>>, %arg8: memref<256x128xf32, #tpu.memory_space<vmem>>) attributes {dimension_semantics = [#tpu.dimension_semantics<parallel>, #tpu.dimension_semantics<parallel>, #tpu.dimension_semantics<arbitrary>], iteration_bounds = array<i64: 2, 1, 1>, scalar_prefetch = 0 : i64, scratch_operands = 0 : i64, tpu.core_type = #tpu.core_type<tc>, window_params = [{transform_indices = @transform_0, window_bounds = array<i64: 256, 128>}, {transform_indices = @transform_1, window_bounds = array<i64: 128, 128>}, {transform_indices = @transform_2, window_bounds = array<i64: 1, 128>}, {transform_indices = @transform_3, window_bounds = array<i64: 128, 128>}, {transform_indices = @transform_4, window_bounds = array<i64: 1, 128>}, {transform_indices = @transform_5, window_bounds = array<i64: 256, 128>}]} {
    %c0 = arith.constant 0 : index
    %c0_0 = arith.constant 0 : index
    %0 = vector.load %arg3[%c0, %c0_0] : memref<256x128xf32, #tpu.memory_space<vmem>>, vector<256x128xf32>
    %c0_1 = arith.constant 0 : index
    %c0_2 = arith.constant 0 : index
    %1 = vector.load %arg4[%c0_1, %c0_2] : memref<128x128xf32, #tpu.memory_space<vmem>>, vector<128x128xf32>
    %cst = arith.constant dense<0.000000e+00> : vector<256x128xf32>
    %2 = tpu.matmul %0, %1, %cst {dimension_numbers = #tpu.dot_dimension_numbers<[1], [0], [0], [1], [0, 0, 1, 1], [], []>} : vector<256x128xf32>, vector<128x128xf32>, vector<256x128xf32> -> vector<256x128xf32>
    %c0_3 = arith.constant 0 : index
    %c0_4 = arith.constant 0 : index
    %3 = vector.load %arg5[%c0_3, %c0_4] : memref<1x128xf32, #tpu.memory_space<vmem>>, vector<1x128xf32>
    %4 = vector.broadcast %3 : vector<1x128xf32> to vector<256x128xf32>
    %5 = arith.addf %2, %4 : vector<256x128xf32>
    %cst_5 = arith.constant 5.000000e-01 : f32
    %6 = vector.broadcast %cst_5 : f32 to vector<256x128xf32>
    %7 = arith.mulf %6, %5 : vector<256x128xf32>
    %cst_6 = arith.constant 0.707106769 : f32
    %8 = vector.broadcast %cst_6 : f32 to vector<256x128xf32>
    %9 = arith.mulf %5, %8 : vector<256x128xf32>
    %10 = math.erf %9 : vector<256x128xf32>
    %cst_7 = arith.constant 1.000000e+00 : f32
    %11 = vector.broadcast %cst_7 : f32 to vector<256x128xf32>
    %12 = arith.addf %11, %10 : vector<256x128xf32>
    %13 = arith.mulf %7, %12 : vector<256x128xf32>
    %c0_8 = arith.constant 0 : index
    %c0_9 = arith.constant 0 : index
    %14 = vector.load %arg6[%c0_8, %c0_9] : memref<128x128xf32, #tpu.memory_space<vmem>>, vector<128x128xf32>
    %cst_10 = arith.constant dense<0.000000e+00> : vector<256x128xf32>
    %15 = tpu.matmul %13, %14, %cst_10 {dimension_numbers = #tpu.dot_dimension_numbers<[1], [0], [0], [1], [0, 0, 1, 1], [], []>} : vector<256x128xf32>, vector<128x128xf32>, vector<256x128xf32> -> vector<256x128xf32>
    %c0_11 = arith.constant 0 : index
    %c0_12 = arith.constant 0 : index
    %16 = vector.load %arg7[%c0_11, %c0_12] : memref<1x128xf32, #tpu.memory_space<vmem>>, vector<1x128xf32>
    %17 = vector.broadcast %16 : vector<1x128xf32> to vector<256x128xf32>
    %18 = arith.addf %15, %17 : vector<256x128xf32>
    %c0_13 = arith.constant 0 : index
    %c0_14 = arith.constant 0 : index
    %19 = vector.load %arg8[%c0_13, %c0_14] : memref<256x128xf32, #tpu.memory_space<vmem>>, vector<256x128xf32>
    tpu.vector_store %arg8[%c0_13, %c0_14], %18 {strides = array<i32>} : memref<256x128xf32, #tpu.memory_space<vmem>>, vector<256x128xf32>,
    return
  }
  func.func @transform_0(%arg0: i32, %arg1: i32, %arg2: i32) -> (i32, i32) {
    %c0_i32 = arith.constant 0 : i32
    %c0_i32_0 = arith.constant 0 : i32
    return %arg0, %c0_i32 : i32, i32
  }
  func.func @transform_1(%arg0: i32, %arg1: i32, %arg2: i32) -> (i32, i32) {
    %c0_i32 = arith.constant 0 : i32
    %c0_i32_0 = arith.constant 0 : i32
    return %c0_i32, %arg2 : i32, i32
  }
  func.func @transform_2(%arg0: i32, %arg1: i32, %arg2: i32) -> (i32, i32) {
    %c0_i32 = arith.constant 0 : i32
    %c0_i32_0 = arith.constant 0 : i32
    return %c0_i32, %arg2 : i32, i32
  }
  func.func @transform_3(%arg0: i32, %arg1: i32, %arg2: i32) -> (i32, i32) {
    %c0_i32 = arith.constant 0 : i32
    return %arg2, %arg1 : i32, i32
  }
  func.func @transform_4(%arg0: i32, %arg1: i32, %arg2: i32) -> (i32, i32) {
    %c0_i32 = arith.constant 0 : i32
    %c0_i32_0 = arith.constant 0 : i32
    return %c0_i32, %arg1 : i32, i32
  }
  func.func @transform_5(%arg0: i32, %arg1: i32, %arg2: i32) -> (i32, i32) {
    %c0_i32 = arith.constant 0 : i32
    return %arg0, %arg1 : i32, i32
  }
}

</mosaic_0001>

<llo_original>
// kernel: tpu_custom_call.1
$region0: #{tpu_custom_call.1}
  #allocation0 [shape = 'u32[]', space=smem, size = 0x4, offset = 0x4, fixed_abs, tag = 'smem constant byte address 0x4 - core index']
  #allocation1 [shape = 'u32[144,128]{1,0:T(1,128)}', space=vmem, size = 0x12000, scoped, tag = 'internal scratch']
  %s0 = inlined_call_operand.hbm [shape: f32[512,128], index: 0, kind: input, shape index: {}]
  %s1 = inlined_call_operand.hbm [shape: f32[128,128], index: 1, kind: input, shape index: {}]
  %s2 = inlined_call_operand.vmem [shape: f32[1,128], index: 2, kind: input, shape index: {}]
  %s3 = inlined_call_operand.hbm [shape: f32[128,128], index: 3, kind: input, shape index: {}]
  %s4 = inlined_call_operand.vmem [shape: f32[1,128], index: 4, kind: input, shape index: {}]
  %s5 = inlined_call_operand.hbm [shape: f32[512,128], index: 5, kind: output, shape index: {}]
  %s6 = sld [smem:[#allocation0]]
  $region65: #{tpu_custom_call.1} parent=0
    _
  %s8 = ssub.s32 1, %s6
  %s9 = scalar_select 0, %s8, %s6
  $region1: #{tpu_custom_call.1} parent=0
    #allocation2 [shape = 'u8[262144]{0}', space=vmem, size = 0x40000, scoped, tag = 'input window, operand 0']
    #allocation3 [shape = 's32[2]{0}', space=sflag, size = 0x8, scoped, tag = 'scoped memory for tpu_custom_call.1']
    #allocation4 [shape = 's32[2]{0}', space=sflag, size = 0x8, scoped, tag = 'scoped memory for tpu_custom_call.1']
    #allocation5 [shape = 'u8[65536]{0}', space=vmem, size = 0x10000, scoped, tag = 'input window, operand 1, single buffered']
    #allocation6 [shape = 's32[1]{0}', space=sflag, size = 0x4, scoped, tag = 'scoped memory for tpu_custom_call.1']
    #allocation7 [shape = 'u8[65536]{0}', space=vmem, size = 0x10000, scoped, tag = 'input window, operand 3, single buffered']
    #allocation8 [shape = 'u8[262144]{0}', space=vmem, size = 0x40000, scoped, tag = 'output window, operand 0']
    %10 = vsyncpa [#allocation3], 0
    %s11 = scalar_lea.sflag [#allocation3], 1
    %12 = vsyncpa %s11, 0
    %13 = vsyncpa [#allocation6], 0
    %14 = vsyncpa [#allocation4], 0
    %s15 = scalar_lea.sflag [#allocation4], 1
    %16 = vsyncpa %s15, 0
    loop: start=0, step=1, limit=4
    $region2: #{tpu_custom_call.1} parent=1 // loop_pre_header
      _
    $region3: #{tpu_custom_call.1} parent=1 // loop_header
      %s18 = sphi 0, %s22
      %p19 = scmp.ge.s32.totalorder %s18, 4
      %s25 = sphi 0, %s44
      %s26 = sphi 0, %s40
      %s27 = sphi 0, %s36
      %s28 = sphi 0, %s25
      %s29 = sphi 0, %s26
      %s30 = sphi 0, %s27
      %s31 = sphi 0, %s28
      %s32 = sphi 0, %s29
      %s33 = sphi 0, %s30
      %s47 = sphi 0, %s49
      %s50 = sphi 0, %s47
      %s51 = sphi 0, %s50
      %s67 = sphi 0, %s51
      %s73 = sphi 0, %s75
      %s76 = sphi 0, %s73
      %s77 = sphi 0, %s76
      %s93 = sphi 0, %s77
      %s99 = sphi 0, %s101
      %s102 = sphi 0, %s99
      %s103 = sphi 0, %s102
      %s119 = sphi 0, %s103
      %s127 = sphi 0, %s129
      %s130 = sphi 0, %s127
      %s131 = sphi 0, %s130
      %s147 = sphi 0, %s131
      %s153 = sphi 0, %s155
      %s156 = sphi 0, %s153
      %s157 = sphi 0, %s156
      %s173 = sphi 0, %s157
      %s181 = sphi 0, %s183
      %s184 = sphi 0, %s181
      %s185 = sphi 0, %s184
      %s201 = sphi 0, %s185
    $region4: #{tpu_custom_call.1} parent=1 // loop_header_branch
      %21 = sbr.rel (%p19) target = $region8
    $region5: #{tpu_custom_call.1} parent=1 // loop_body
      %s23 = ssub.s32 %s18, 1
      %s24 = ssub.s32 %s18, 2
      %s34 = sadd.s32 1, %s27
      %p35 = scmp.ge.s32.totalorder %s34, 1
      %s36 = scalar_select %p35, 0, %s34
      %s37 = sadd.s32 1, %s26
      %s38 = scalar_select %p35, %s37, %s26
      %p39 = scmp.ge.s32.totalorder %s38, 1
      %s40 = scalar_select %p39, 0, %s38
      %s41 = sadd.s32 1, %s25
      %s42 = scalar_select %p39, %s41, %s25
      %p43 = scmp.ge.s32.totalorder %s42, 2
      %s44 = scalar_select %p43, 0, %s42
      %s45 = ssub.s32 %s25, %s44
      %p46 = scmp.eq.s32.totalorder %s45, 0
      %s48 = sadd.s32 %s47, 1
      %s49 = scalar_select %p46, %s47, %s48
      %p52 = pneg %p46
      %p53 = scmp.eq.s32.totalorder %s18, 1
      %p54 = por %p52, %p53
      %p55 = scmp.ne.s32.totalorder %s47, %s50
      %p56 = scmp.eq.s32.totalorder %s18, 0
      %p57 = por %p55, %p56
      %p58 = scmp.ne.s32.totalorder %s47, %s50
      %p59 = scmp.eq.s32.totalorder %s23, 1
      %p60 = por %p58, %p59
      %p61 = scmp.ne.s32.totalorder %s50, %s51
      %p62 = scmp.eq.s32.totalorder %s23, 0
      %p63 = por %p61, %p62
      %p64 = scmp.ne.s32.totalorder %s50, %s51
      %p65 = scmp.eq.s32.totalorder %s24, 1
      %p66 = por %p64, %p65
      %p68 = scmp.ne.s32.totalorder %s51, %s67
      %p69 = scmp.eq.s32.totalorder %s24, 0
      %p70 = por %p68, %p69
      %s71 = ssub.s32 %s27, %s36
      %p72 = scmp.eq.s32.totalorder %s71, 0
      %s74 = sadd.s32 %s73, 1
      %s75 = scalar_select %p72, %s73, %s74
      %p78 = pneg %p72
      %p79 = scmp.eq.s32.totalorder %s18, 1
      %p80 = por %p78, %p79
      %p81 = scmp.ne.s32.totalorder %s73, %s76
      %p82 = scmp.eq.s32.totalorder %s18, 0
      %p83 = por %p81, %p82
      %p84 = scmp.ne.s32.totalorder %s73, %s76
      %p85 = scmp.eq.s32.totalorder %s23, 1
      %p86 = por %p84, %p85
      %p87 = scmp.ne.s32.totalorder %s76, %s77
      %p88 = scmp.eq.s32.totalorder %s23, 0
      %p89 = por %p87, %p88
      %p90 = scmp.ne.s32.totalorder %s76, %s77
      %p91 = scmp.eq.s32.totalorder %s24, 1
      %p92 = por %p90, %p91
      %p94 = scmp.ne.s32.totalorder %s77, %s93
      %p95 = scmp.eq.s32.totalorder %s24, 0
      %p96 = por %p94, %p95
      %s97 = ssub.s32 %s27, %s36
      %p98 = scmp.eq.s32.totalorder %s97, 0
      %s100 = sadd.s32 %s99, 1
      %s101 = scalar_select %p98, %s99, %s100
      %p104 = pneg %p98
      %p105 = scmp.eq.s32.totalorder %s18, 1
      %p106 = por %p104, %p105
      %p107 = scmp.ne.s32.totalorder %s99, %s102
      %p108 = scmp.eq.s32.totalorder %s18, 0
      %p109 = por %p107, %p108
      %p110 = scmp.ne.s32.totalorder %s99, %s102
      %p111 = scmp.eq.s32.totalorder %s23, 1
      %p112 = por %p110, %p111
      %p113 = scmp.ne.s32.totalorder %s102, %s103
      %p114 = scmp.eq.s32.totalorder %s23, 0
      %p115 = por %p113, %p114
      %p116 = scmp.ne.s32.totalorder %s102, %s103
      %p117 = scmp.eq.s32.totalorder %s24, 1
      %p118 = por %p116, %p117
      %p120 = scmp.ne.s32.totalorder %s103, %s119
      %p121 = scmp.eq.s32.totalorder %s24, 0
      %p122 = por %p120, %p121
      %s123 = ssub.s32 %s27, %s36
      %s124 = ssub.s32 %s26, %s40
      %s125 = sor.u32 %s123, %s124
      %p126 = scmp.eq.s32.totalorder %s125, 0
      %s128 = sadd.s32 %s127, 1
      %s129 = scalar_select %p126, %s127, %s128
      %p132 = pneg %p126
      %p133 = scmp.eq.s32.totalorder %s18, 1
      %p134 = por %p132, %p133
      %p135 = scmp.ne.s32.totalorder %s127, %s130
      %p136 = scmp.eq.s32.totalorder %s18, 0
      %p137 = por %p135, %p136
      %p138 = scmp.ne.s32.totalorder %s127, %s130
      %p139 = scmp.eq.s32.totalorder %s23, 1
      %p140 = por %p138, %p139
      %p141 = scmp.ne.s32.totalorder %s130, %s131
      %p142 = scmp.eq.s32.totalorder %s23, 0
      %p143 = por %p141, %p142
      %p144 = scmp.ne.s32.totalorder %s130, %s131
      %p145 = scmp.eq.s32.totalorder %s24, 1
      %p146 = por %p144, %p145
      %p148 = scmp.ne.s32.totalorder %s131, %s147
      %p149 = scmp.eq.s32.totalorder %s24, 0
      %p150 = por %p148, %p149
      %s151 = ssub.s32 %s26, %s40
      %p152 = scmp.eq.s32.totalorder %s151, 0
      %s154 = sadd.s32 %s153, 1
      %s155 = scalar_select %p152, %s153, %s154
      %p158 = pneg %p152
      %p159 = scmp.eq.s32.totalorder %s18, 1
      %p160 = por %p158, %p159
      %p161 = scmp.ne.s32.totalorder %s153, %s156
      %p162 = scmp.eq.s32.totalorder %s18, 0
      %p163 = por %p161, %p162
      %p164 = scmp.ne.s32.totalorder %s153, %s156
      %p165 = scmp.eq.s32.totalorder %s23, 1
      %p166 = por %p164, %p165
      %p167 = scmp.ne.s32.totalorder %s156, %s157
      %p168 = scmp.eq.s32.totalorder %s23, 0
      %p169 = por %p167, %p168
      %p170 = scmp.ne.s32.totalorder %s156, %s157
      %p171 = scmp.eq.s32.totalorder %s24, 1
      %p172 = por %p170, %p171
      %p174 = scmp.ne.s32.totalorder %s157, %s173
      %p175 = scmp.eq.s32.totalorder %s24, 0
      %p176 = por %p174, %p175
      %s177 = ssub.s32 %s25, %s44
      %s178 = ssub.s32 %s26, %s40
      %s179 = sor.u32 %s177, %s178
      %p180 = scmp.eq.s32.totalorder %s179, 0
      %s182 = sadd.s32 %s181, 1
      %s183 = scalar_select %p180, %s181, %s182
      %p186 = pneg %p180
      %p187 = scmp.eq.s32.totalorder %s18, 1
      %p188 = por %p186, %p187
      %p189 = scmp.ne.s32.totalorder %s181, %s184
      %p190 = scmp.eq.s32.totalorder %s18, 0
      %p191 = por %p189, %p190
      %p192 = scmp.ne.s32.totalorder %s181, %s184
      %p193 = scmp.eq.s32.totalorder %s23, 1
      %p194 = por %p192, %p193
      %p195 = scmp.ne.s32.totalorder %s184, %s185
      %p196 = scmp.eq.s32.totalorder %s23, 0
      %p197 = por %p195, %p196
      %p198 = scmp.ne.s32.totalorder %s184, %s185
      %p199 = scmp.eq.s32.totalorder %s24, 1
      %p200 = por %p198, %p199
      %p202 = scmp.ne.s32.totalorder %s185, %s201
      %p203 = scmp.eq.s32.totalorder %s24, 0
      %p204 = por %p202, %p203
      %p205 = scmp.le.s32.totalorder 1, %s18
      %p206 = scmp.lt.s32.totalorder %s18, 3
      %p207 = pnand %p205, %p206
      %p208 = pneg %p207
      // Predicated region
      $region9: #{tpu_custom_call.1} parent=5 // pred_check
        _
      $region10: #{tpu_custom_call.1} parent=5 // pred_check_branch
        %210 = sbr.rel (%p207) target = $region12
      $region11: #{tpu_custom_call.1} parent=5 // pred_region
        %s211 = ssub.s32 %s18, 1
        // Predicated region
        $region13: #{tpu_custom_call.1} parent=11 // pred_check
          %p212 = pneg %p89
        $region14: #{tpu_custom_call.1} parent=11 // pred_check_branch
          %214 = sbr.rel (%p212) target = $region16
        $region15: #{tpu_custom_call.1} parent=11 // pred_region
          %s216 = ssub.s32 2048, 2048
          %217 = vsyncadd [#allocation6], %s216
          %s218 = smul.addr %s30, 128
          %s219 = scalar_lea.hbm %s1, %s218
          %s220 = sshll.u32 [#allocation5], 4
          %s221 = int_to_ptr.vmem [resolvable:$true] %s220
          %226 = dma.hbm_to_vmem [thread:$0]  %s219, 2048, %s221, [#allocation6], 128, 128, 8
        $region16: #{tpu_custom_call.1} parent=11 // pred_fallthru
          _
        // Predicated region
        $region17: #{tpu_custom_call.1} parent=11 // pred_check
          %p227 = pneg %p115
        $region18: #{tpu_custom_call.1} parent=11 // pred_check_branch
          %229 = sbr.rel (%p227) target = $region20
        $region19: #{tpu_custom_call.1} parent=11 // pred_region
          %p230 = scmp.lt.s32.totalorder %s30, 0
          %s231 = scalar_select %p230, %s30, 0
          %s232 = scalar_lea.vmem %s2, %s231
        $region20: #{tpu_custom_call.1} parent=11 // pred_fallthru
          _
        // Predicated region
        $region21: #{tpu_custom_call.1} parent=11 // pred_check
          %p233 = pneg %p143
        $region22: #{tpu_custom_call.1} parent=11 // pred_check_branch
          %235 = sbr.rel (%p233) target = $region24
        $region23: #{tpu_custom_call.1} parent=11 // pred_region
          %s236 = smul.u32 16, %s30
          %s238 = ssub.s32 2048, 2048
          %239 = vsyncadd [#allocation6], %s238
          %s240 = sadd.s32 %s29, %s236
          %s241 = smul.addr %s240, 128
          %s242 = scalar_lea.hbm %s3, %s241
          %s243 = sshll.u32 [#allocation7], 4
          %s244 = int_to_ptr.vmem [resolvable:$true] %s243
          %249 = dma.hbm_to_vmem [thread:$0]  %s242, 2048, %s244, [#allocation6], 128, 128, 8
        $region24: #{tpu_custom_call.1} parent=11 // pred_fallthru
          _
        // Predicated region
        $region25: #{tpu_custom_call.1} parent=11 // pred_check
          %p250 = pneg %p169
        $region26: #{tpu_custom_call.1} parent=11 // pred_check_branch
          %252 = sbr.rel (%p250) target = $region28
        $region27: #{tpu_custom_call.1} parent=11 // pred_region
          %p253 = scmp.lt.s32.totalorder %s29, 0
          %s254 = scalar_select %p253, %s29, 0
          %s255 = scalar_lea.vmem %s4, %s254
        $region28: #{tpu_custom_call.1} parent=11 // pred_fallthru
          _
      $region12: #{tpu_custom_call.1} parent=5 // pred_fallthru
        _
      %p256 = scmp.lt.s32.totalorder %s18, 2
      // Predicated region
      $region29: #{tpu_custom_call.1} parent=5 // pred_check
        %p257 = pneg %p256
      $region30: #{tpu_custom_call.1} parent=5 // pred_check_branch
        %259 = sbr.rel (%p257) target = $region32
      $region31: #{tpu_custom_call.1} parent=5 // pred_region
        // Predicated region
        $region33: #{tpu_custom_call.1} parent=31 // pred_check
          %p260 = pneg %p57
        $region34: #{tpu_custom_call.1} parent=31 // pred_check_branch
          %262 = sbr.rel (%p260) target = $region36
        $region35: #{tpu_custom_call.1} parent=31 // pred_region
          %s263 = sand.u32 %s47, 1
          %s264 = scalar_lea.sflag [#allocation3], %s263
          %s265 = sand.u32 %s47, 1
          %s266 = smul.addr %s265, 256
          %s267 = scalar_lea.vmem [#allocation2], %s266
          %s268 = smul.u32 32, %s25
          %s270 = ssub.s32 4096, 4096
          %271 = vsyncadd %s264, %s270
          %s272 = smul.addr %s268, 128
          %s273 = scalar_lea.hbm %s0, %s272
          %s274 = sshll.u32 %s267, 4
          %s275 = int_to_ptr.vmem [resolvable:$true] %s274
          %280 = dma.hbm_to_vmem [thread:$0]  %s273, 4096, %s275, %s264, 128, 128, 8
        $region36: #{tpu_custom_call.1} parent=31 // pred_fallthru
          _
      $region32: #{tpu_custom_call.1} parent=5 // pred_fallthru
        _
      %p281 = scmp.le.s32.totalorder 1, %s18
      %p282 = scmp.lt.s32.totalorder %s18, 3
      %p283 = pnand %p281, %p282
      %p284 = pneg %p283
      // Predicated region
      $region37: #{tpu_custom_call.1} parent=5 // pred_check
        _
      $region38: #{tpu_custom_call.1} parent=5 // pred_check_branch
        %286 = sbr.rel (%p283) target = $region40
      $region39: #{tpu_custom_call.1} parent=5 // pred_region
        %s287 = ssub.s32 %s18, 1
        %s288 = sand.u32 %s50, 1
        %s289 = scalar_lea.sflag [#allocation3], %s288
        %s290 = sand.u32 %s50, 1
        %s291 = smul.addr %s290, 256
        %s292 = scalar_lea.vmem [#allocation2], %s291
        // Predicated region
        $region41: #{tpu_custom_call.1} parent=39 // pred_check
          %p293 = pneg %p63
        $region42: #{tpu_custom_call.1} parent=39 // pred_check_branch
          %295 = sbr.rel (%p293) target = $region44
        $region43: #{tpu_custom_call.1} parent=39 // pred_region
          %296 = dma.done %s289, 4096
        $region44: #{tpu_custom_call.1} parent=39 // pred_fallthru
          _
        // Predicated region
        $region45: #{tpu_custom_call.1} parent=39 // pred_check
          %p297 = pneg %p89
        $region46: #{tpu_custom_call.1} parent=39 // pred_check_branch
          %299 = sbr.rel (%p297) target = $region48
        $region47: #{tpu_custom_call.1} parent=39 // pred_region
          %300 = dma.done [#allocation6], 2048
        $region48: #{tpu_custom_call.1} parent=39 // pred_fallthru
          _
        // Predicated region
        $region49: #{tpu_custom_call.1} parent=39 // pred_check
          %p301 = pneg %p143
        $region50: #{tpu_custom_call.1} parent=39 // pred_check_branch
          %303 = sbr.rel (%p301) target = $region52
        $region51: #{tpu_custom_call.1} parent=39 // pred_region
          %304 = dma.done [#allocation6], 2048
        $region52: #{tpu_custom_call.1} parent=39 // pred_fallthru
          _
        %s305 = sand.u32 %s50, 1
        %s306 = scalar_lea.sflag [#allocation3], %s305
        %s307 = sand.u32 %s50, 1
        %s308 = smul.addr %s307, 256
        %s309 = scalar_lea.vmem [#allocation2], %s308
        %p310 = pneg %p63
        %p311 = pneg %p60
        %p312 = pneg %p89
        %p313 = pneg %p86
        %p314 = scmp.lt.s32.totalorder %s30, 0
        %s315 = scalar_select %p314, %s30, 0
        %s316 = scalar_lea.vmem %s2, %s315
        %p317 = pneg %p115
        %p318 = pneg %p112
        %p319 = pneg %p143
        %p320 = pneg %p140
        %p321 = scmp.lt.s32.totalorder %s29, 0
        %s322 = scalar_select %p321, %s29, 0
        %s323 = scalar_lea.vmem %s4, %s322
        %p324 = pneg %p169
        %p325 = pneg %p166
        %p326 = pneg %p197
        %p327 = pneg %p194
        %s328 = sand.u32 %s184, 1
        %s329 = scalar_lea.sflag [#allocation4], %s328
        %s330 = sand.u32 %s184, 1
        %s331 = smul.addr %s330, 256
        %s332 = scalar_lea.vmem [#allocation8], %s331
        %s333 = smul.u32 32, %s28
        %p334 = scmp.lt.s32.totalorder %s30, 0
        %s335 = scalar_select %p334, %s30, 0
        %s336 = scalar_lea.vmem %s2, %s335
        %s337 = smul.u32 16, %s30
        %p338 = scmp.lt.s32.totalorder %s29, 0
        %s339 = scalar_select %p338, %s29, 0
        %s340 = scalar_lea.vmem %s4, %s339
        %s341 = smul.u32 32, %s28
        %v342 = vld [vmem:[%s292] sm:$0xff]
        %v343 = vld [vmem:[%s292 + $0x8] sm:$0xff]
        %v344 = vld [vmem:[%s292 + $0x10] sm:$0xff]
        %v345 = vld [vmem:[%s292 + $0x18] sm:$0xff]
        %v346 = vld [vmem:[%s292 + $0x20] sm:$0xff]
        %v347 = vld [vmem:[%s292 + $0x28] sm:$0xff]
        %v348 = vld [vmem:[%s292 + $0x30] sm:$0xff]
        %v349 = vld [vmem:[%s292 + $0x38] sm:$0xff]
        %v350 = vld [vmem:[%s292 + $0x40] sm:$0xff]
        %v351 = vld [vmem:[%s292 + $0x48] sm:$0xff]
        %v352 = vld [vmem:[%s292 + $0x50] sm:$0xff]
        %v353 = vld [vmem:[%s292 + $0x58] sm:$0xff]
        %v354 = vld [vmem:[%s292 + $0x60] sm:$0xff]
        %v355 = vld [vmem:[%s292 + $0x68] sm:$0xff]
        %v356 = vld [vmem:[%s292 + $0x70] sm:$0xff]
        %v357 = vld [vmem:[%s292 + $0x78] sm:$0xff]
        %v358 = vld [vmem:[%s292 + $0x80] sm:$0xff]
        %v359 = vld [vmem:[%s292 + $0x88] sm:$0xff]
        %v360 = vld [vmem:[%s292 + $0x90] sm:$0xff]
        %v361 = vld [vmem:[%s292 + $0x98] sm:$0xff]
        %v362 = vld [vmem:[%s292 + $0xa0] sm:$0xff]
        %v363 = vld [vmem:[%s292 + $0xa8] sm:$0xff]
        %v364 = vld [vmem:[%s292 + $0xb0] sm:$0xff]
        %v365 = vld [vmem:[%s292 + $0xb8] sm:$0xff]
        %v366 = vld [vmem:[%s292 + $0xc0] sm:$0xff]
        %v367 = vld [vmem:[%s292 + $0xc8] sm:$0xff]
        %v368 = vld [vmem:[%s292 + $0xd0] sm:$0xff]
        %v369 = vld [vmem:[%s292 + $0xd8] sm:$0xff]
        %v370 = vld [vmem:[%s292 + $0xe0] sm:$0xff]
        %v371 = vld [vmem:[%s292 + $0xe8] sm:$0xff]
        %v372 = vld [vmem:[%s292 + $0xf0] sm:$0xff]
        %v373 = vld [vmem:[%s292 + $0xf8] sm:$0xff]
        %v374 = vld [vmem:[#allocation5] sm:$0xff]
        %v375 = vld [vmem:[#allocation5 + $0x8] sm:$0xff]
        %v376 = vld [vmem:[#allocation5 + $0x10] sm:$0xff]
        %v377 = vld [vmem:[#allocation5 + $0x18] sm:$0xff]
        %v378 = vld [vmem:[#allocation5 + $0x20] sm:$0xff]
        %v379 = vld [vmem:[#allocation5 + $0x28] sm:$0xff]
        %v380 = vld [vmem:[#allocation5 + $0x30] sm:$0xff]
        %v381 = vld [vmem:[#allocation5 + $0x38] sm:$0xff]
        %v382 = vld [vmem:[#allocation5 + $0x40] sm:$0xff]
        %v383 = vld [vmem:[#allocation5 + $0x48] sm:$0xff]
        %v384 = vld [vmem:[#allocation5 + $0x50] sm:$0xff]
        %v385 = vld [vmem:[#allocation5 + $0x58] sm:$0xff]
        %v386 = vld [vmem:[#allocation5 + $0x60] sm:$0xff]
        %v387 = vld [vmem:[#allocation5 + $0x68] sm:$0xff]
        %v388 = vld [vmem:[#allocation5 + $0x70] sm:$0xff]
        %v389 = vld [vmem:[#allocation5 + $0x78] sm:$0xff]
        %v390 = vld [vmem:[%s336] sm:$0x1]
        %v392 = vlaneseq
        %v393 = vshrl.u32 %v392, 7
        %v394 = vsub.s32 0, %v393
        %v395 = vrot.slane %v390, %v394
        %397 = vmatprep.subr.mxu0 0.0
        %398 = vmatpush1.msra.mxu0 %v389
        %399 = vmatprep.subr.mxu0 0.0
        %400 = vmatpush1.msra.mxu0 %v388
        %401 = vmatprep.subr.mxu0 0.0
        %402 = vmatpush1.msra.mxu0 %v387
        %403 = vmatprep.subr.mxu0 0.0
        %404 = vmatpush1.msra.mxu0 %v386
        %405 = vmatprep.subr.mxu0 0.0
        %406 = vmatpush1.msra.mxu0 %v385
        %407 = vmatprep.subr.mxu0 0.0
        %408 = vmatpush1.msra.mxu0 %v384
        %409 = vmatprep.subr.mxu0 0.0
        %410 = vmatpush1.msra.mxu0 %v383
        %411 = vmatprep.subr.mxu0 0.0
        %412 = vmatpush1.msra.mxu0 %v382
        %413 = vmatprep.subr.mxu0 0.0
        %414 = vmatpush1.msra.mxu0 %v381
        %415 = vmatprep.subr.mxu0 0.0
        %416 = vmatpush1.msra.mxu0 %v380
        %417 = vmatprep.subr.mxu0 0.0
        %418 = vmatpush1.msra.mxu0 %v379
        %419 = vmatprep.subr.mxu0 0.0
        %420 = vmatpush1.msra.mxu0 %v378
        %421 = vmatprep.subr.mxu0 0.0
        %422 = vmatpush1.msra.mxu0 %v377
        %423 = vmatprep.subr.mxu0 0.0
        %424 = vmatpush1.msra.mxu0 %v376
        %425 = vmatprep.subr.mxu0 0.0
        %426 = vmatpush1.msra.mxu0 %v375
        %427 = vmatprep.subr.mxu0 0.0
        %428 = vmatpush1.msra.mxu0 %v374
        %429 = vmatprep.subr.mxu0 0.0
        %430 = vmatpush2.msra.mxu0 0.0
        %431 = vmatprep.subr.mxu0 0.0
        %432 = vmatpush2.msra.mxu0 0.0
        %433 = vmatprep.subr.mxu0 0.0
        %434 = vmatpush2.msra.mxu0 0.0
        %435 = vmatprep.subr.mxu0 0.0
        %436 = vmatpush2.msra.mxu0 0.0
        %437 = vmatprep.subr.mxu0 0.0
        %438 = vmatpush2.msra.mxu0 0.0
        %439 = vmatprep.subr.mxu0 0.0
        %440 = vmatpush2.msra.mxu0 0.0
        %441 = vmatprep.subr.mxu0 0.0
        %442 = vmatpush2.msra.mxu0 0.0
        %443 = vmatprep.subr.mxu0 0.0
        %444 = vmatpush2.msra.mxu0 0.0
        %445 = vmatprep.subr.mxu0 0.0
        %446 = vmatpush2.msra.mxu0 0.0
        %447 = vmatprep.subr.mxu0 0.0
        %448 = vmatpush2.msra.mxu0 0.0
        %449 = vmatprep.subr.mxu0 0.0
        %450 = vmatpush2.msra.mxu0 0.0
        %451 = vmatprep.subr.mxu0 0.0
        %452 = vmatpush2.msra.mxu0 0.0
        %453 = vmatprep.subr.mxu0 0.0
        %454 = vmatpush2.msra.mxu0 0.0
        %455 = vmatprep.subr.mxu0 0.0
        %456 = vmatpush2.msra.mxu0 0.0
        %457 = vmatprep.subr.mxu0 0.0
        %458 = vmatpush2.msra.mxu0 0.0
        %459 = vmatprep.subr.mxu0 0.0
        %460 = vmatpush2.msra.mxu0 0.0
        %461 = vmatprep.mubr.f32.mxu0 0.0
        %462 = vmatmul.mubr.f32.gmra.mxu0 %v342
        %v463 = vpop.f32.mrf.mxu0
        %v464 = vadd.f32 %v395, %v463
        %v465 = vpop.f32.mrf.mxu0
        %466 = vmatprep.mubr.f32.mxu0 0.0
        %467 = vmatmul.mubr.f32.gmra.mxu0 %v343
        %v468 = vpop.f32.mrf.mxu0
        %v469 = vadd.f32 %v395, %v468
        %v470 = vpop.f32.mrf.mxu0
        %471 = vmatprep.mubr.f32.mxu0 0.0
        %472 = vmatmul.mubr.f32.gmra.mxu0 %v344
        %v473 = vpop.f32.mrf.mxu0
        %v474 = vadd.f32 %v395, %v473
        %v475 = vpop.f32.mrf.mxu0
        %476 = vmatprep.mubr.f32.mxu0 0.0
        %477 = vmatmul.mubr.f32.gmra.mxu0 %v345
        %v478 = vpop.f32.mrf.mxu0
        %v479 = vadd.f32 %v395, %v478
        %v480 = vpop.f32.mrf.mxu0
        %481 = vmatprep.mubr.f32.mxu0 0.0
        %482 = vmatmul.mubr.f32.gmra.mxu0 %v346
        %v483 = vpop.f32.mrf.mxu0
        %v484 = vadd.f32 %v395, %v483
        %v485 = vpop.f32.mrf.mxu0
        %486 = vmatprep.mubr.f32.mxu0 0.0
        %487 = vmatmul.mubr.f32.gmra.mxu0 %v347
        %v488 = vpop.f32.mrf.mxu0
        %v489 = vadd.f32 %v395, %v488
        %v490 = vpop.f32.mrf.mxu0
        %491 = vmatprep.mubr.f32.mxu0 0.0
        %492 = vmatmul.mubr.f32.gmra.mxu0 %v348
        %v493 = vpop.f32.mrf.mxu0
        %v494 = vadd.f32 %v395, %v493
        %v495 = vpop.f32.mrf.mxu0
        %496 = vmatprep.mubr.f32.mxu0 0.0
        %497 = vmatmul.mubr.f32.gmra.mxu0 %v349
        %v498 = vpop.f32.mrf.mxu0
        %v499 = vadd.f32 %v395, %v498
        %v500 = vpop.f32.mrf.mxu0
        %501 = vmatprep.mubr.f32.mxu0 0.0
        %502 = vmatmul.mubr.f32.gmra.mxu0 %v350
        %v503 = vpop.f32.mrf.mxu0
        %v504 = vadd.f32 %v395, %v503
        %v505 = vpop.f32.mrf.mxu0
        %506 = vmatprep.mubr.f32.mxu0 0.0
        %507 = vmatmul.mubr.f32.gmra.mxu0 %v351
        %v508 = vpop.f32.mrf.mxu0
        %v509 = vadd.f32 %v395, %v508
        %v510 = vpop.f32.mrf.mxu0
        %511 = vmatprep.mubr.f32.mxu0 0.0
        %512 = vmatmul.mubr.f32.gmra.mxu0 %v352
        %v513 = vpop.f32.mrf.mxu0
        %v514 = vadd.f32 %v395, %v513
        %v515 = vpop.f32.mrf.mxu0
        %516 = vmatprep.mubr.f32.mxu0 0.0
        %517 = vmatmul.mubr.f32.gmra.mxu0 %v353
        %v518 = vpop.f32.mrf.mxu0
        %v519 = vadd.f32 %v395, %v518
        %v520 = vpop.f32.mrf.mxu0
        %521 = vmatprep.mubr.f32.mxu0 0.0
        %522 = vmatmul.mubr.f32.gmra.mxu0 %v354
        %v523 = vpop.f32.mrf.mxu0
        %v524 = vadd.f32 %v395, %v523
        %v525 = vpop.f32.mrf.mxu0
        %526 = vmatprep.mubr.f32.mxu0 0.0
        %527 = vmatmul.mubr.f32.gmra.mxu0 %v355
        %v528 = vpop.f32.mrf.mxu0
        %v529 = vadd.f32 %v395, %v528
        %v530 = vpop.f32.mrf.mxu0
        %531 = vmatprep.mubr.f32.mxu0 0.0
        %532 = vmatmul.mubr.f32.gmra.mxu0 %v356
        %v533 = vpop.f32.mrf.mxu0
        %v534 = vadd.f32 %v395, %v533
        %v535 = vpop.f32.mrf.mxu0
        %536 = vmatprep.mubr.f32.mxu0 0.0
        %537 = vmatmul.mubr.f32.gmra.mxu0 %v357
        %v538 = vpop.f32.mrf.mxu0
        %v539 = vadd.f32 %v395, %v538
        %v540 = vpop.f32.mrf.mxu0
        %541 = vmatprep.mubr.f32.mxu0 0.0
        %542 = vmatmul.mubr.f32.gmra.mxu0 %v358
        %v543 = vpop.f32.mrf.mxu0
        %v544 = vadd.f32 %v395, %v543
        %v545 = vpop.f32.mrf.mxu0
        %546 = vmatprep.mubr.f32.mxu0 0.0
        %547 = vmatmul.mubr.f32.gmra.mxu0 %v359
        %v548 = vpop.f32.mrf.mxu0
        %v549 = vadd.f32 %v395, %v548
        %v550 = vpop.f32.mrf.mxu0
        %551 = vmatprep.mubr.f32.mxu0 0.0
        %552 = vmatmul.mubr.f32.gmra.mxu0 %v360
        %v553 = vpop.f32.mrf.mxu0
        %v554 = vadd.f32 %v395, %v553
        %v555 = vpop.f32.mrf.mxu0
        %556 = vmatprep.mubr.f32.mxu0 0.0
        %557 = vmatmul.mubr.f32.gmra.mxu0 %v361
        %v558 = vpop.f32.mrf.mxu0
        %v559 = vadd.f32 %v395, %v558
        %v560 = vpop.f32.mrf.mxu0
        %561 = vmatprep.mubr.f32.mxu0 0.0
        %562 = vmatmul.mubr.f32.gmra.mxu0 %v362
        %v563 = vpop.f32.mrf.mxu0
        %v564 = vadd.f32 %v395, %v563
        %v565 = vpop.f32.mrf.mxu0
        %566 = vmatprep.mubr.f32.mxu0 0.0
        %567 = vmatmul.mubr.f32.gmra.mxu0 %v363
        %v568 = vpop.f32.mrf.mxu0
        %v569 = vadd.f32 %v395, %v568
        %v570 = vpop.f32.mrf.mxu0
        %571 = vmatprep.mubr.f32.mxu0 0.0
        %572 = vmatmul.mubr.f32.gmra.mxu0 %v364
        %v573 = vpop.f32.mrf.mxu0
        %v574 = vadd.f32 %v395, %v573
        %v575 = vpop.f32.mrf.mxu0
        %576 = vmatprep.mubr.f32.mxu0 0.0
        %577 = vmatmul.mubr.f32.gmra.mxu0 %v365
        %v578 = vpop.f32.mrf.mxu0
        %v579 = vadd.f32 %v395, %v578
        %v580 = vpop.f32.mrf.mxu0
        %581 = vmatprep.mubr.f32.mxu0 0.0
        %582 = vmatmul.mubr.f32.gmra.mxu0 %v366
        %v583 = vpop.f32.mrf.mxu0
        %v584 = vadd.f32 %v395, %v583
        %v585 = vpop.f32.mrf.mxu0
        %586 = vmatprep.mubr.f32.mxu0 0.0
        %587 = vmatmul.mubr.f32.gmra.mxu0 %v367
        %v588 = vpop.f32.mrf.mxu0
        %v589 = vadd.f32 %v395, %v588
        %v590 = vpop.f32.mrf.mxu0
        %591 = vmatprep.mubr.f32.mxu0 0.0
        %592 = vmatmul.mubr.f32.gmra.mxu0 %v368
        %v593 = vpop.f32.mrf.mxu0
        %v594 = vadd.f32 %v395, %v593
        %v595 = vpop.f32.mrf.mxu0
        %596 = vmatprep.mubr.f32.mxu0 0.0
        %597 = vmatmul.mubr.f32.gmra.mxu0 %v369
        %v598 = vpop.f32.mrf.mxu0
        %v599 = vadd.f32 %v395, %v598
        %v600 = vpop.f32.mrf.mxu0
        %601 = vmatprep.mubr.f32.mxu0 0.0
        %602 = vmatmul.mubr.f32.gmra.mxu0 %v370
        %v603 = vpop.f32.mrf.mxu0
        %v604 = vadd.f32 %v395, %v603
        %v605 = vpop.f32.mrf.mxu0
        %606 = vmatprep.mubr.f32.mxu0 0.0
        %607 = vmatmul.mubr.f32.gmra.mxu0 %v371
        %v608 = vpop.f32.mrf.mxu0
        %v609 = vadd.f32 %v395, %v608
        %v610 = vpop.f32.mrf.mxu0
        %611 = vmatprep.mubr.f32.mxu0 0.0
        %612 = vmatmul.mubr.f32.gmra.mxu0 %v372
        %v613 = vpop.f32.mrf.mxu0
        %v614 = vadd.f32 %v395, %v613
        %v615 = vpop.f32.mrf.mxu0
        %616 = vmatprep.mubr.f32.mxu0 0.0
        %617 = vmatmul.mubr.f32.gmra.mxu0 %v373
        %v618 = vpop.f32.mrf.mxu0
        %v619 = vadd.f32 %v395, %v618
        %v620 = vpop.f32.mrf.mxu0
        %621 = vdwg.mxu0
        %v622 = vmul.f32 %v464, 0.5
        %v623 = vmul.f32 %v469, 0.5
        %v624 = vmul.f32 %v474, 0.5
        %v625 = vmul.f32 %v479, 0.5
        %v626 = vmul.f32 %v484, 0.5
        %v627 = vmul.f32 %v489, 0.5
        %v628 = vmul.f32 %v494, 0.5
        %v629 = vmul.f32 %v499, 0.5
        %v630 = vmul.f32 %v504, 0.5
        %v631 = vmul.f32 %v509, 0.5
        %v632 = vmul.f32 %v514, 0.5
        %v633 = vmul.f32 %v519, 0.5
        %v634 = vmul.f32 %v524, 0.5
        %v635 = vmul.f32 %v529, 0.5
        %v636 = vmul.f32 %v534, 0.5
        %v637 = vmul.f32 %v539, 0.5
        %v638 = vmul.f32 %v544, 0.5
        %v639 = vmul.f32 %v549, 0.5
        %v640 = vmul.f32 %v554, 0.5
        %v641 = vmul.f32 %v559, 0.5
        %v642 = vmul.f32 %v564, 0.5
        %v643 = vmul.f32 %v569, 0.5
        %v644 = vmul.f32 %v574, 0.5
        %v645 = vmul.f32 %v579, 0.5
        %v646 = vmul.f32 %v584, 0.5
        %v647 = vmul.f32 %v589, 0.5
        %v648 = vmul.f32 %v594, 0.5
        %v649 = vmul.f32 %v599, 0.5
        %v650 = vmul.f32 %v604, 0.5
        %v651 = vmul.f32 %v609, 0.5
        %v652 = vmul.f32 %v614, 0.5
        %v653 = vmul.f32 %v619, 0.5
        %v654 = vmul.f32 %v464, 0.70710677
        %v655 = vmul.f32 %v469, 0.70710677
        %v656 = vmul.f32 %v474, 0.70710677
        %v657 = vmul.f32 %v479, 0.70710677
        %v658 = vmul.f32 %v484, 0.70710677
        %v659 = vmul.f32 %v489, 0.70710677
        %v660 = vmul.f32 %v494, 0.70710677
        %v661 = vmul.f32 %v499, 0.70710677
        %v662 = vmul.f32 %v504, 0.70710677
        %v663 = vmul.f32 %v509, 0.70710677
        %v664 = vmul.f32 %v514, 0.70710677
        %v665 = vmul.f32 %v519, 0.70710677
        %v666 = vmul.f32 %v524, 0.70710677
        %v667 = vmul.f32 %v529, 0.70710677
        %v668 = vmul.f32 %v534, 0.70710677
        %v669 = vmul.f32 %v539, 0.70710677
        %v670 = vmul.f32 %v544, 0.70710677
        %v671 = vmul.f32 %v549, 0.70710677
        %v672 = vmul.f32 %v554, 0.70710677
        %v673 = vmul.f32 %v559, 0.70710677
        %v674 = vmul.f32 %v564, 0.70710677
        %v675 = vmul.f32 %v569, 0.70710677
        %v676 = vmul.f32 %v574, 0.70710677
        %v677 = vmul.f32 %v579, 0.70710677
        %v678 = vmul.f32 %v584, 0.70710677
        %v679 = vmul.f32 %v589, 0.70710677
        %v680 = vmul.f32 %v594, 0.70710677
        %v681 = vmul.f32 %v599, 0.70710677
        %v682 = vmul.f32 %v604, 0.70710677
        %v683 = vmul.f32 %v609, 0.70710677
        %v684 = vmul.f32 %v614, 0.70710677
        %v685 = vmul.f32 %v619, 0.70710677
        %v686 = verf.f32.pop %v654
        %v687 = verf.f32.pop %v655
        %v688 = verf.f32.pop %v656
        %v689 = verf.f32.pop %v657
        %v690 = verf.f32.pop %v658
        %v691 = verf.f32.pop %v659
        %v692 = verf.f32.pop %v660
        %v693 = verf.f32.pop %v661
        %v694 = verf.f32.pop %v662
        %v695 = verf.f32.pop %v663
        %v696 = verf.f32.pop %v664
        %v697 = verf.f32.pop %v665
        %v698 = verf.f32.pop %v666
        %v699 = verf.f32.pop %v667
        %v700 = verf.f32.pop %v668
        %v701 = verf.f32.pop %v669
        %v702 = verf.f32.pop %v670
        %v703 = verf.f32.pop %v671
        %v704 = verf.f32.pop %v672
        %v705 = verf.f32.pop %v673
        %v706 = verf.f32.pop %v674
        %v707 = verf.f32.pop %v675
        %v708 = verf.f32.pop %v676
        %v709 = verf.f32.pop %v677
        %v710 = verf.f32.pop %v678
        %v711 = verf.f32.pop %v679
        %v712 = verf.f32.pop %v680
        %v713 = verf.f32.pop %v681
        %v714 = verf.f32.pop %v682
        %v715 = verf.f32.pop %v683
        %v716 = verf.f32.pop %v684
        %v717 = verf.f32.pop %v685
        %v718 = vadd.f32 %v686, 1.0
        %v719 = vadd.f32 %v687, 1.0
        %v720 = vadd.f32 %v688, 1.0
        %v721 = vadd.f32 %v689, 1.0
        %v722 = vadd.f32 %v690, 1.0
        %v723 = vadd.f32 %v691, 1.0
        %v724 = vadd.f32 %v692, 1.0
        %v725 = vadd.f32 %v693, 1.0
        %v726 = vadd.f32 %v694, 1.0
        %v727 = vadd.f32 %v695, 1.0
        %v728 = vadd.f32 %v696, 1.0
        %v729 = vadd.f32 %v697, 1.0
        %v730 = vadd.f32 %v698, 1.0
        %v731 = vadd.f32 %v699, 1.0
        %v732 = vadd.f32 %v700, 1.0
        %v733 = vadd.f32 %v701, 1.0
        %v734 = vadd.f32 %v702, 1.0
        %v735 = vadd.f32 %v703, 1.0
        %v736 = vadd.f32 %v704, 1.0
        %v737 = vadd.f32 %v705, 1.0
        %v738 = vadd.f32 %v706, 1.0
        %v739 = vadd.f32 %v707, 1.0
        %v740 = vadd.f32 %v708, 1.0
        %v741 = vadd.f32 %v709, 1.0
        %v742 = vadd.f32 %v710, 1.0
        %v743 = vadd.f32 %v711, 1.0
        %v744 = vadd.f32 %v712, 1.0
        %v745 = vadd.f32 %v713, 1.0
        %v746 = vadd.f32 %v714, 1.0
        %v747 = vadd.f32 %v715, 1.0
        %v748 = vadd.f32 %v716, 1.0
        %v749 = vadd.f32 %v717, 1.0
        %v750 = vmul.f32 %v622, %v718
        %v751 = vmul.f32 %v623, %v719
        %v752 = vmul.f32 %v624, %v720
        %v753 = vmul.f32 %v625, %v721
        %v754 = vmul.f32 %v626, %v722
        %v755 = vmul.f32 %v627, %v723
        %v756 = vmul.f32 %v628, %v724
        %v757 = vmul.f32 %v629, %v725
        %v758 = vmul.f32 %v630, %v726
        %v759 = vmul.f32 %v631, %v727
        %v760 = vmul.f32 %v632, %v728
        %v761 = vmul.f32 %v633, %v729
        %v762 = vmul.f32 %v634, %v730
        %v763 = vmul.f32 %v635, %v731
        %v764 = vmul.f32 %v636, %v732
        %v765 = vmul.f32 %v637, %v733
        %v766 = vmul.f32 %v638, %v734
        %v767 = vmul.f32 %v639, %v735
        %v768 = vmul.f32 %v640, %v736
        %v769 = vmul.f32 %v641, %v737
        %v770 = vmul.f32 %v642, %v738
        %v771 = vmul.f32 %v643, %v739
        %v772 = vmul.f32 %v644, %v740
        %v773 = vmul.f32 %v645, %v741
        %v774 = vmul.f32 %v646, %v742
        %v775 = vmul.f32 %v647, %v743
        %v776 = vmul.f32 %v648, %v744
        %v777 = vmul.f32 %v649, %v745
        %v778 = vmul.f32 %v650, %v746
        %v779 = vmul.f32 %v651, %v747
        %v780 = vmul.f32 %v652, %v748
        %v781 = vmul.f32 %v653, %v749
        %v782 = vld [vmem:[#allocation7] sm:$0xff]
        %v783 = vld [vmem:[#allocation7 + $0x8] sm:$0xff]
        %v784 = vld [vmem:[#allocation7 + $0x10] sm:$0xff]
        %v785 = vld [vmem:[#allocation7 + $0x18] sm:$0xff]
        %v786 = vld [vmem:[#allocation7 + $0x20] sm:$0xff]
        %v787 = vld [vmem:[#allocation7 + $0x28] sm:$0xff]
        %v788 = vld [vmem:[#allocation7 + $0x30] sm:$0xff]
        %v789 = vld [vmem:[#allocation7 + $0x38] sm:$0xff]
        %v790 = vld [vmem:[#allocation7 + $0x40] sm:$0xff]
        %v791 = vld [vmem:[#allocation7 + $0x48] sm:$0xff]
        %v792 = vld [vmem:[#allocation7 + $0x50] sm:$0xff]
        %v793 = vld [vmem:[#allocation7 + $0x58] sm:$0xff]
        %v794 = vld [vmem:[#allocation7 + $0x60] sm:$0xff]
        %v795 = vld [vmem:[#allocation7 + $0x68] sm:$0xff]
        %v796 = vld [vmem:[#allocation7 + $0x70] sm:$0xff]
        %v797 = vld [vmem:[#allocation7 + $0x78] sm:$0xff]
        %v798 = vld [vmem:[%s340] sm:$0x1]
        %v800 = vlaneseq
        %v801 = vshrl.u32 %v800, 7
        %v802 = vsub.s32 0, %v801
        %v803 = vrot.slane %v798, %v802
        %805 = vmatprep.subr.mxu0 0.0
        %806 = vmatpush1.msra.mxu0 %v797
        %807 = vmatprep.subr.mxu0 0.0
        %808 = vmatpush1.msra.mxu0 %v796
        %809 = vmatprep.subr.mxu0 0.0
        %810 = vmatpush1.msra.mxu0 %v795
        %811 = vmatprep.subr.mxu0 0.0
        %812 = vmatpush1.msra.mxu0 %v794
        %813 = vmatprep.subr.mxu0 0.0
        %814 = vmatpush1.msra.mxu0 %v793
        %815 = vmatprep.subr.mxu0 0.0
        %816 = vmatpush1.msra.mxu0 %v792
        %817 = vmatprep.subr.mxu0 0.0
        %818 = vmatpush1.msra.mxu0 %v791
        %819 = vmatprep.subr.mxu0 0.0
        %820 = vmatpush1.msra.mxu0 %v790
        %821 = vmatprep.subr.mxu0 0.0
        %822 = vmatpush1.msra.mxu0 %v789
        %823 = vmatprep.subr.mxu0 0.0
        %824 = vmatpush1.msra.mxu0 %v788
        %825 = vmatprep.subr.mxu0 0.0
        %826 = vmatpush1.msra.mxu0 %v787
        %827 = vmatprep.subr.mxu0 0.0
        %828 = vmatpush1.msra.mxu0 %v786
        %829 = vmatprep.subr.mxu0 0.0
        %830 = vmatpush1.msra.mxu0 %v785
        %831 = vmatprep.subr.mxu0 0.0
        %832 = vmatpush1.msra.mxu0 %v784
        %833 = vmatprep.subr.mxu0 0.0
        %834 = vmatpush1.msra.mxu0 %v783
        %835 = vmatprep.subr.mxu0 0.0
        %836 = vmatpush1.msra.mxu0 %v782
        %837 = vmatprep.subr.mxu0 0.0
        %838 = vmatpush2.msra.mxu0 0.0
        %839 = vmatprep.subr.mxu0 0.0
        %840 = vmatpush2.msra.mxu0 0.0
        %841 = vmatprep.subr.mxu0 0.0
        %842 = vmatpush2.msra.mxu0 0.0
        %843 = vmatprep.subr.mxu0 0.0
        %844 = vmatpush2.msra.mxu0 0.0
        %845 = vmatprep.subr.mxu0 0.0
        %846 = vmatpush2.msra.mxu0 0.0
        %847 = vmatprep.subr.mxu0 0.0
        %848 = vmatpush2.msra.mxu0 0.0
        %849 = vmatprep.subr.mxu0 0.0
        %850 = vmatpush2.msra.mxu0 0.0
        %851 = vmatprep.subr.mxu0 0.0
        %852 = vmatpush2.msra.mxu0 0.0
        %853 = vmatprep.subr.mxu0 0.0
        %854 = vmatpush2.msra.mxu0 0.0
        %855 = vmatprep.subr.mxu0 0.0
        %856 = vmatpush2.msra.mxu0 0.0
        %857 = vmatprep.subr.mxu0 0.0
        %858 = vmatpush2.msra.mxu0 0.0
        %859 = vmatprep.subr.mxu0 0.0
        %860 = vmatpush2.msra.mxu0 0.0
        %861 = vmatprep.subr.mxu0 0.0
        %862 = vmatpush2.msra.mxu0 0.0
        %863 = vmatprep.subr.mxu0 0.0
        %864 = vmatpush2.msra.mxu0 0.0
        %865 = vmatprep.subr.mxu0 0.0
        %866 = vmatpush2.msra.mxu0 0.0
        %867 = vmatprep.subr.mxu0 0.0
        %868 = vmatpush2.msra.mxu0 0.0
        %869 = vmatprep.mubr.f32.mxu0 0.0
        %870 = vmatmul.mubr.f32.gmra.mxu0 %v750
        %v871 = vpop.f32.mrf.mxu0
        %v872 = vadd.f32 %v803, %v871
        %v873 = vpop.f32.mrf.mxu0
        %874 = vmatprep.mubr.f32.mxu0 0.0
        %875 = vmatmul.mubr.f32.gmra.mxu0 %v751
        %v876 = vpop.f32.mrf.mxu0
        %v877 = vadd.f32 %v803, %v876
        %v878 = vpop.f32.mrf.mxu0
        %879 = vmatprep.mubr.f32.mxu0 0.0
        %880 = vmatmul.mubr.f32.gmra.mxu0 %v752
        %v881 = vpop.f32.mrf.mxu0
        %v882 = vadd.f32 %v803, %v881
        %v883 = vpop.f32.mrf.mxu0
        %884 = vmatprep.mubr.f32.mxu0 0.0
        %885 = vmatmul.mubr.f32.gmra.mxu0 %v753
        %v886 = vpop.f32.mrf.mxu0
        %v887 = vadd.f32 %v803, %v886
        %v888 = vpop.f32.mrf.mxu0
        %889 = vmatprep.mubr.f32.mxu0 0.0
        %890 = vmatmul.mubr.f32.gmra.mxu0 %v754
        %v891 = vpop.f32.mrf.mxu0
        %v892 = vadd.f32 %v803, %v891
        %v893 = vpop.f32.mrf.mxu0
        %894 = vmatprep.mubr.f32.mxu0 0.0
        %895 = vmatmul.mubr.f32.gmra.mxu0 %v755
        %v896 = vpop.f32.mrf.mxu0
        %v897 = vadd.f32 %v803, %v896
        %v898 = vpop.f32.mrf.mxu0
        %899 = vmatprep.mubr.f32.mxu0 0.0
        %900 = vmatmul.mubr.f32.gmra.mxu0 %v756
        %v901 = vpop.f32.mrf.mxu0
        %v902 = vadd.f32 %v803, %v901
        %v903 = vpop.f32.mrf.mxu0
        %904 = vmatprep.mubr.f32.mxu0 0.0
        %905 = vmatmul.mubr.f32.gmra.mxu0 %v757
        %v906 = vpop.f32.mrf.mxu0
        %v907 = vadd.f32 %v803, %v906
        %v908 = vpop.f32.mrf.mxu0
        %909 = vmatprep.mubr.f32.mxu0 0.0
        %910 = vmatmul.mubr.f32.gmra.mxu0 %v758
        %v911 = vpop.f32.mrf.mxu0
        %v912 = vadd.f32 %v803, %v911
        %v913 = vpop.f32.mrf.mxu0
        %914 = vmatprep.mubr.f32.mxu0 0.0
        %915 = vmatmul.mubr.f32.gmra.mxu0 %v759
        %v916 = vpop.f32.mrf.mxu0
        %v917 = vadd.f32 %v803, %v916
        %v918 = vpop.f32.mrf.mxu0
        %919 = vmatprep.mubr.f32.mxu0 0.0
        %920 = vmatmul.mubr.f32.gmra.mxu0 %v760
        %v921 = vpop.f32.mrf.mxu0
        %v922 = vadd.f32 %v803, %v921
        %v923 = vpop.f32.mrf.mxu0
        %924 = vmatprep.mubr.f32.mxu0 0.0
        %925 = vmatmul.mubr.f32.gmra.mxu0 %v761
        %v926 = vpop.f32.mrf.mxu0
        %v927 = vadd.f32 %v803, %v926
        %v928 = vpop.f32.mrf.mxu0
        %929 = vmatprep.mubr.f32.mxu0 0.0
        %930 = vmatmul.mubr.f32.gmra.mxu0 %v762
        %v931 = vpop.f32.mrf.mxu0
        %v932 = vadd.f32 %v803, %v931
        %v933 = vpop.f32.mrf.mxu0
        %934 = vmatprep.mubr.f32.mxu0 0.0
        %935 = vmatmul.mubr.f32.gmra.mxu0 %v763
        %v936 = vpop.f32.mrf.mxu0
        %v937 = vadd.f32 %v803, %v936
        %v938 = vpop.f32.mrf.mxu0
        %939 = vmatprep.mubr.f32.mxu0 0.0
        %940 = vmatmul.mubr.f32.gmra.mxu0 %v764
        %v941 = vpop.f32.mrf.mxu0
        %v942 = vadd.f32 %v803, %v941
        %v943 = vpop.f32.mrf.mxu0
        %944 = vmatprep.mubr.f32.mxu0 0.0
        %945 = vmatmul.mubr.f32.gmra.mxu0 %v765
        %v946 = vpop.f32.mrf.mxu0
        %v947 = vadd.f32 %v803, %v946
        %v948 = vpop.f32.mrf.mxu0
        %949 = vmatprep.mubr.f32.mxu0 0.0
        %950 = vmatmul.mubr.f32.gmra.mxu0 %v766
        %v951 = vpop.f32.mrf.mxu0
        %v952 = vadd.f32 %v803, %v951
        %v953 = vpop.f32.mrf.mxu0
        %954 = vmatprep.mubr.f32.mxu0 0.0
        %955 = vmatmul.mubr.f32.gmra.mxu0 %v767
        %v956 = vpop.f32.mrf.mxu0
        %v957 = vadd.f32 %v803, %v956
        %v958 = vpop.f32.mrf.mxu0
        %959 = vmatprep.mubr.f32.mxu0 0.0
        %960 = vmatmul.mubr.f32.gmra.mxu0 %v768
        %v961 = vpop.f32.mrf.mxu0
        %v962 = vadd.f32 %v803, %v961
        %v963 = vpop.f32.mrf.mxu0
        %964 = vmatprep.mubr.f32.mxu0 0.0
        %965 = vmatmul.mubr.f32.gmra.mxu0 %v769
        %v966 = vpop.f32.mrf.mxu0
        %v967 = vadd.f32 %v803, %v966
        %v968 = vpop.f32.mrf.mxu0
        %969 = vmatprep.mubr.f32.mxu0 0.0
        %970 = vmatmul.mubr.f32.gmra.mxu0 %v770
        %v971 = vpop.f32.mrf.mxu0
        %v972 = vadd.f32 %v803, %v971
        %v973 = vpop.f32.mrf.mxu0
        %974 = vmatprep.mubr.f32.mxu0 0.0
        %975 = vmatmul.mubr.f32.gmra.mxu0 %v771
        %v976 = vpop.f32.mrf.mxu0
        %v977 = vadd.f32 %v803, %v976
        %v978 = vpop.f32.mrf.mxu0
        %979 = vmatprep.mubr.f32.mxu0 0.0
        %980 = vmatmul.mubr.f32.gmra.mxu0 %v772
        %v981 = vpop.f32.mrf.mxu0
        %v982 = vadd.f32 %v803, %v981
        %v983 = vpop.f32.mrf.mxu0
        %984 = vmatprep.mubr.f32.mxu0 0.0
        %985 = vmatmul.mubr.f32.gmra.mxu0 %v773
        %v986 = vpop.f32.mrf.mxu0
        %v987 = vadd.f32 %v803, %v986
        %v988 = vpop.f32.mrf.mxu0
        %989 = vmatprep.mubr.f32.mxu0 0.0
        %990 = vmatmul.mubr.f32.gmra.mxu0 %v774
        %v991 = vpop.f32.mrf.mxu0
        %v992 = vadd.f32 %v803, %v991
        %v993 = vpop.f32.mrf.mxu0
        %994 = vmatprep.mubr.f32.mxu0 0.0
        %995 = vmatmul.mubr.f32.gmra.mxu0 %v775
        %v996 = vpop.f32.mrf.mxu0
        %v997 = vadd.f32 %v803, %v996
        %v998 = vpop.f32.mrf.mxu0
        %999 = vmatprep.mubr.f32.mxu0 0.0
        %1000 = vmatmul.mubr.f32.gmra.mxu0 %v776
        %v1001 = vpop.f32.mrf.mxu0
        %v1002 = vadd.f32 %v803, %v1001
        %v1003 = vpop.f32.mrf.mxu0
        %1004 = vmatprep.mubr.f32.mxu0 0.0
        %1005 = vmatmul.mubr.f32.gmra.mxu0 %v777
        %v1006 = vpop.f32.mrf.mxu0
        %v1007 = vadd.f32 %v803, %v1006
        %v1008 = vpop.f32.mrf.mxu0
        %1009 = vmatprep.mubr.f32.mxu0 0.0
        %1010 = vmatmul.mubr.f32.gmra.mxu0 %v778
        %v1011 = vpop.f32.mrf.mxu0
        %v1012 = vadd.f32 %v803, %v1011
        %v1013 = vpop.f32.mrf.mxu0
        %1014 = vmatprep.mubr.f32.mxu0 0.0
        %1015 = vmatmul.mubr.f32.gmra.mxu0 %v779
        %v1016 = vpop.f32.mrf.mxu0
        %v1017 = vadd.f32 %v803, %v1016
        %v1018 = vpop.f32.mrf.mxu0
        %1019 = vmatprep.mubr.f32.mxu0 0.0
        %1020 = vmatmul.mubr.f32.gmra.mxu0 %v780
        %v1021 = vpop.f32.mrf.mxu0
        %v1022 = vadd.f32 %v803, %v1021
        %v1023 = vpop.f32.mrf.mxu0
        %1024 = vmatprep.mubr.f32.mxu0 0.0
        %1025 = vmatmul.mubr.f32.gmra.mxu0 %v781
        %v1026 = vpop.f32.mrf.mxu0
        %v1027 = vadd.f32 %v803, %v1026
        %v1028 = vpop.f32.mrf.mxu0
        %1029 = vdwg.mxu0
        %1030 = vst [vmem:[%s332] sm:$0xff] %v872
        %1031 = vst [vmem:[%s332 + $0x8] sm:$0xff] %v877
        %1032 = vst [vmem:[%s332 + $0x10] sm:$0xff] %v882
        %1033 = vst [vmem:[%s332 + $0x18] sm:$0xff] %v887
        %1034 = vst [vmem:[%s332 + $0x20] sm:$0xff] %v892
        %1035 = vst [vmem:[%s332 + $0x28] sm:$0xff] %v897
        %1036 = vst [vmem:[%s332 + $0x30] sm:$0xff] %v902
        %1037 = vst [vmem:[%s332 + $0x38] sm:$0xff] %v907
        %1038 = vst [vmem:[%s332 + $0x40] sm:$0xff] %v912
        %1039 = vst [vmem:[%s332 + $0x48] sm:$0xff] %v917
        %1040 = vst [vmem:[%s332 + $0x50] sm:$0xff] %v922
        %1041 = vst [vmem:[%s332 + $0x58] sm:$0xff] %v927
        %1042 = vst [vmem:[%s332 + $0x60] sm:$0xff] %v932
        %1043 = vst [vmem:[%s332 + $0x68] sm:$0xff] %v937
        %1044 = vst [vmem:[%s332 + $0x70] sm:$0xff] %v942
        %1045 = vst [vmem:[%s332 + $0x78] sm:$0xff] %v947
        %1046 = vst [vmem:[%s332 + $0x80] sm:$0xff] %v952
        %1047 = vst [vmem:[%s332 + $0x88] sm:$0xff] %v957
        %1048 = vst [vmem:[%s332 + $0x90] sm:$0xff] %v962
        %1049 = vst [vmem:[%s332 + $0x98] sm:$0xff] %v967
        %1050 = vst [vmem:[%s332 + $0xa0] sm:$0xff] %v972
        %1051 = vst [vmem:[%s332 + $0xa8] sm:$0xff] %v977
        %1052 = vst [vmem:[%s332 + $0xb0] sm:$0xff] %v982
        %1053 = vst [vmem:[%s332 + $0xb8] sm:$0xff] %v987
        %1054 = vst [vmem:[%s332 + $0xc0] sm:$0xff] %v992
        %1055 = vst [vmem:[%s332 + $0xc8] sm:$0xff] %v997
        %1056 = vst [vmem:[%s332 + $0xd0] sm:$0xff] %v1002
        %1057 = vst [vmem:[%s332 + $0xd8] sm:$0xff] %v1007
        %1058 = vst [vmem:[%s332 + $0xe0] sm:$0xff] %v1012
        %1059 = vst [vmem:[%s332 + $0xe8] sm:$0xff] %v1017
        %1060 = vst [vmem:[%s332 + $0xf0] sm:$0xff] %v1022
        %1061 = vst [vmem:[%s332 + $0xf8] sm:$0xff] %v1027
        %s1062 = sand.u32 %s184, 1
        %s1063 = scalar_lea.sflag [#allocation4], %s1062
        %s1064 = sand.u32 %s184, 1
        %s1065 = smul.addr %s1064, 256
        %s1066 = scalar_lea.vmem [#allocation8], %s1065
        // Predicated region
        $region53: #{tpu_custom_call.1} parent=39 // pred_check
          %p1067 = pneg %p194
        $region54: #{tpu_custom_call.1} parent=39 // pred_check_branch
          %1069 = sbr.rel (%p1067) target = $region56
        $region55: #{tpu_custom_call.1} parent=39 // pred_region
          %s1070 = smul.u32 32, %s28
          %s1072 = ssub.s32 4096, 4096
          %1073 = vsyncadd %s1063, %s1072
          %s1074 = sadd.s32 %s29, %s1070
          %s1075 = smul.addr %s1074, 128
          %s1076 = scalar_lea.hbm %s5, %s1075
          %s1077 = sshll.u32 %s1066, 4
          %s1078 = int_to_ptr.vmem [resolvable:$true] %s1077
          %1083 = dma.vmem_to_hbm [thread:$0]  %s1078, 4096, %s1076, %s1063, 128, 128, 8
        $region56: #{tpu_custom_call.1} parent=39 // pred_fallthru
          _
      $region40: #{tpu_custom_call.1} parent=5 // pred_fallthru
        _
      %p1084 = scmp.le.s32.totalorder 2, %s18
      // Predicated region
      $region57: #{tpu_custom_call.1} parent=5 // pred_check
        %p1085 = pneg %p1084
      $region58: #{tpu_custom_call.1} parent=5 // pred_check_branch
        %1087 = sbr.rel (%p1085) target = $region60
      $region59: #{tpu_custom_call.1} parent=5 // pred_region
        %s1088 = ssub.s32 %s18, 2
        // Predicated region
        $region61: #{tpu_custom_call.1} parent=59 // pred_check
          %p1089 = pneg %p200
        $region62: #{tpu_custom_call.1} parent=59 // pred_check_branch
          %1091 = sbr.rel (%p1089) target = $region64
        $region63: #{tpu_custom_call.1} parent=59 // pred_region
          %s1092 = sand.u32 %s185, 1
          %s1093 = scalar_lea.sflag [#allocation4], %s1092
          %s1094 = sand.u32 %s185, 1
          %s1095 = smul.addr %s1094, 256
          %s1096 = scalar_lea.vmem [#allocation8], %s1095
          %1097 = dma.done %s1093, 4096
        $region64: #{tpu_custom_call.1} parent=59 // pred_fallthru
          _
      $region60: #{tpu_custom_call.1} parent=5 // pred_fallthru
        _
    $region6: #{tpu_custom_call.1} parent=1 // loop_footer
      %s22 = sadd.s32 1, %s18
    $region7: #{tpu_custom_call.1} parent=1 // loop_footer_branch
      %17 = sbr.rel target = $region3
    $region8: #{tpu_custom_call.1} parent=1 // loop_exit
      _
    %1098 = vsyncpa [#allocation3], 1
    %s1099 = scalar_lea.sflag [#allocation3], 1
    %1100 = vsyncpa %s1099, 1
    %1101 = vsyncpa [#allocation6], 1
    %1102 = vsyncpa [#allocation4], 1
    %s1103 = scalar_lea.sflag [#allocation4], 1
    %1104 = vsyncpa %s1103, 1

</llo_original>
